<compile_context>
chip_gen: v6e
topology: v6e:2x2x1
jax: 0.10.0
libtpu: 0.0.40
codegen_flags: <defaults>
</compile_context>

<pallas_src>
import functools
import math

import jax
import jax.numpy as jnp
from jax import lax
from jax.experimental import pallas as pl
from jax.experimental.pallas import tpu as pltpu


# ----------------------------- Pallas kernels ------------------------------

def _proj_kernel(x_ref, w_ref, b_ref, *o_refs):
    """Full-width projections y_i = x @ W_i + b_i for each stacked weight i.

    x: (tm, d_model); w: (n, d_model, d_model) (already transposed to in x out, resident);
    b: (n, 1, d_model) f32 (resident); o_i: (tm, d_model) lane-dense output blocks.
    """
    x = x_ref[...]
    for i, o_ref in enumerate(o_refs):
        y = jnp.dot(x, w_ref[i], preferred_element_type=jnp.float32)
        o_ref[...] = (y + b_ref[i]).astype(o_ref.dtype)


def _attn_kernel(*refs, h, d_k, has_mask, emit_probs):
    """Fused flash attention (online softmax over KV tiles, all heads in-body) plus the
    output projection, for one (batch, q-tile) lane-dense output block.

    Grid: (B, n_q, n_kv); the trailing axis is an 'arbitrary' reduction.
    """
    q_ref, k_ref, v_ref = refs[0], refs[1], refs[2]
    pos = 3
    mask_ref = None
    if has_mask:
        mask_ref = refs[pos]
        pos += 1
    wo_ref, bo_ref = refs[pos], refs[pos + 1]
    pos += 2
    o_ref = refs[pos]
    pos += 1
    p_ref = None
    if emit_probs:
        p_ref = refs[pos]
        pos += 1
    m_sc, l_sc, ctx_sc = refs[pos], refs[pos + 1], refs[pos + 2]

    ki = pl.program_id(2)
    n_kv = pl.num_programs(2)

    @pl.when(ki == 0)
    def _():  # fresh (b, q-tile): reset the online-softmax state for every head
        m_sc[...] = jnp.full_like(m_sc, -jnp.inf)
        l_sc[...] = jnp.zeros_like(l_sc)
        ctx_sc[...] = jnp.zeros_like(ctx_sc)

    if has_mask:
        # Additive -1e9 bias computed ONCE per (q-tile, kv-tile), shared across heads;
        # integer compare (no int8->f32 convert of the mask tile).
        mbias = jnp.where(mask_ref[...] == 0, jnp.float32(-1e9), jnp.float32(0.0))

    for hh in range(h):                       # static unroll over heads
        cols = slice(hh * d_k, (hh + 1) * d_k)
        q_h = q_ref[:, cols]                  # (tq, d_k) static lane slice
        k_h = k_ref[:, cols]
        v_h = v_ref[:, cols]
        # scores = q_h @ k_h.T  (1/sqrt(d_k) is pre-folded into Wq/bq)
        s = lax.dot_general(q_h, k_h,
                            dimension_numbers=(((1,), (1,)), ((), ())),
                            preferred_element_type=jnp.float32)         # (tq, tkv)
        if has_mask:
            s = s + mbias

        m_prev = m_sc[hh]
        m_new = jnp.maximum(m_prev, jnp.max(s, axis=-1, keepdims=True))
        alpha = jnp.exp(m_prev - m_new)
        p = jnp.exp(s - m_new)
        l_new = alpha * l_sc[hh] + jnp.sum(p, axis=-1, keepdims=True)
        l_sc[hh] = l_new
        ctx_sc[:, cols] = alpha * ctx_sc[:, cols] + jnp.dot(
            p.astype(v_h.dtype), v_h, preferred_element_type=jnp.float32)
        m_sc[hh] = m_new

        if emit_probs:  # wrapper guarantees n_kv == 1, so l_new is the final row sum
            p_ref[hh] = (p / l_new).astype(p_ref.dtype)   # exact (non-approx) normalize

    @pl.when(ki == n_kv - 1)
    def _():  # all KV tiles folded: normalize per head, then ONE full-depth projection
        for hh in range(h):
            cols = slice(hh * d_k, (hh + 1) * d_k)
            ctx_sc[:, cols] = ctx_sc[:, cols] * pl.reciprocal(l_sc[hh], approx=True)
        out = jnp.dot(ctx_sc[...].astype(wo_ref.dtype), wo_ref[...],
                      preferred_element_type=jnp.float32)
        o_ref[...] = (out + bo_ref[...]).astype(o_ref.dtype)


# ------------------------------ wrappers ------------------------------------

def _default_tile(n, target):
    if n <= target:
        return n
    if n % target == 0:
        return target
    return math.gcd(n, target)


def _project(x, weights, biases, *, tm=None, out_dtype, vmem_limit_bytes):
    """x: (B, S, d_model); weights: list of PyTorch-layout (out, in) matrices;
    biases: list of (d_model,). Returns tuple of len(weights) lane-dense
    (B, S, d_model) arrays in out_dtype (no head split, no transpose afterwards)."""
    B, S, d_model = x.shape
    n = len(weights)
    tm = tm or _default_tile(S, 256)
    assert S % tm == 0
    n_m = S // tm

    w_stack = jnp.stack([w.T for w in weights]).astype(out_dtype)       # (n, in, out)
    b_stack = jnp.stack([b.reshape(1, d_model) for b in biases]).astype(jnp.float32)

    cost = pl.CostEstimate(
        flops=int(2 * n * B * S * d_model * d_model),
        transcendentals=0,
        bytes_accessed=int(jnp.dtype(out_dtype).itemsize * B * S * d_model * (1 + n)
                           + jnp.dtype(out_dtype).itemsize * n * d_model * d_model))

    outs = pl.pallas_call(
        _proj_kernel,
        grid=(B, n_m),
        in_specs=[
            pl.BlockSpec((None, tm, d_model), lambda b, mi: (b, mi, 0)),
            pl.BlockSpec((n, d_model, d_model), lambda b, mi: (0, 0, 0)),  # resident
            pl.BlockSpec((n, 1, d_model), lambda b, mi: (0, 0, 0)),        # resident
        ],
        out_specs=[pl.BlockSpec((None, tm, d_model), lambda b, mi: (b, mi, 0))
                   for _ in range(n)],
        out_shape=[jax.ShapeDtypeStruct((B, S, d_model), out_dtype) for _ in range(n)],
        compiler_params=pltpu.CompilerParams(
            dimension_semantics=("parallel", "parallel"),
            vmem_limit_bytes=vmem_limit_bytes),
        cost_estimate=cost,
    )(x.astype(out_dtype), w_stack, b_stack)
    return tuple(outs)


def _attention_output(q, k, v, mask3, wo_t, bo, *, h, d_k, tq, tkv,
                      return_attn, out_dtype, vmem_limit_bytes):
    """q/k/v: (B, Sq|Skv, d_model) lane-dense; mask3: None or (1|B, Sq, Skv) int8;
    wo_t: (d_model, d_model) pre-transposed; bo: (d_model,).
    Returns (out (B, Sq, d_model), p_attn (B, h, Sq, Skv) f32 or None)."""
    B, Sq, d_model = q.shape
    Skv = k.shape[1]
    assert Sq % tq == 0 and Skv % tkv == 0
    n_q, n_kv = Sq // tq, Skv // tkv
    has_mask = mask3 is not None

    in_specs = [
        pl.BlockSpec((None, tq, d_model), lambda b, qi, ki: (b, qi, 0)),
        pl.BlockSpec((None, tkv, d_model), lambda b, qi, ki: (b, ki, 0)),
        pl.BlockSpec((None, tkv, d_model), lambda b, qi, ki: (b, ki, 0)),
    ]
    inputs = [q, k, v]
    if has_mask:
        if mask3.shape[0] == B:
            mask_idx = lambda b, qi, ki: (b, qi, ki)
        else:  # single mask shared across the batch (PyTorch 2-D mask semantics)
            mask_idx = lambda b, qi, ki: (0, qi, ki)
        in_specs.append(pl.BlockSpec((None, tq, tkv), mask_idx))
        inputs.append(mask3)
    in_specs += [
        pl.BlockSpec((d_model, d_model), lambda b, qi, ki: (0, 0)),   # Wo resident
        pl.BlockSpec((1, d_model), lambda b, qi, ki: (0, 0)),         # bo resident
    ]
    inputs += [wo_t, bo.reshape(1, d_model).astype(jnp.float32)]

    out_shape = [jax.ShapeDtypeStruct((B, Sq, d_model), out_dtype)]
    out_specs = [pl.BlockSpec((None, tq, d_model), lambda b, qi, ki: (b, qi, 0))]
    if return_attn:
        assert n_kv == 1, "exact p_attn requires a single KV tile"
        out_shape.append(jax.ShapeDtypeStruct((B, h, Sq, Skv), jnp.float32))
        out_specs.append(pl.BlockSpec((None, h, tq, Skv),
                                      lambda b, qi, ki: (b, 0, qi, 0)))

    scratch_shapes = [
        pltpu.VMEM((h, tq, 1), jnp.float32),      # running max per head
        pltpu.VMEM((h, tq, 1), jnp.float32),      # running denom per head
        pltpu.VMEM((tq, d_model), jnp.float32),   # concatenated per-head contexts
    ]

    kernel = functools.partial(_attn_kernel, h=h, d_k=d_k,
                               has_mask=has_mask, emit_probs=return_attn)
    itm = jnp.dtype(q.dtype).itemsize
    cost = pl.CostEstimate(
        flops=int(4 * B * Sq * Skv * d_model + 2 * B * Sq * d_model * d_model),
        transcendentals=int(B * h * Sq * Skv),
        bytes_accessed=int(itm * B * (Sq * d_model + 2 * n_q * Skv * d_model)
                           + 4 * B * Sq * d_model + itm * d_model * d_model))

    results = pl.pallas_call(
        kernel,
        grid=(B, n_q, n_kv),
        in_specs=in_specs,
        out_specs=out_specs,
        out_shape=out_shape,
        scratch_shapes=scratch_shapes,
        compiler_params=pltpu.CompilerParams(
            dimension_semantics=("parallel", "parallel", "arbitrary"),
            vmem_limit_bytes=vmem_limit_bytes),
        cost_estimate=cost,
    )(*inputs)
    if return_attn:
        return results[0], results[1]
    return results[0], None


def multi_headed_attention(params, query, key, value, mask=None, *, h,
                           return_attn=False, qkv_dtype=jnp.bfloat16,
                           out_dtype=jnp.float32, tm=None, tq=None, tkv=None,
                           vmem_limit_bytes=48 * 1024 * 1024):
    """Forward pass matching MultiHeadedAttention.forward (dropout = identity)."""
    B, Sq, d_model = query.shape
    Skv = key.shape[1]
    assert key.shape == value.shape
    assert d_model % h == 0
    d_k = d_model // h
    scale = 1.0 / math.sqrt(d_k)
    cdt = jnp.dtype(qkv_dtype)

    # Tile defaults: tq=128, tkv=256 keeps the f32 (tq, tkv) scores tile at 128 KiB
    # (~half the vreg file); prefer larger tq on v5e when memory-bound.
    tq = tq or _default_tile(Sq, 128)
    tkv = Skv if return_attn else (tkv or _default_tile(Skv, 256))

    # One-time weight transforms: fold 1/sqrt(d_k) into Wq/bq (no in-loop scaling).
    wq = params["wq"] * scale
    bq = params["bq"] * scale

    proj = functools.partial(_project, tm=tm, out_dtype=cdt,
                             vmem_limit_bytes=vmem_limit_bytes)
    if query is key and key is value:       # self-attention: one fused QKV pass
        q, k, v = proj(query, [wq, params["wk"], params["wv"]],
                       [bq, params["bk"], params["bv"]])
    elif key is value:                      # shared K/V source: two passes
        (q,) = proj(query, [wq], [bq])
        k, v = proj(key, [params["wk"], params["wv"]],
                    [params["bk"], params["bv"]])
    else:                                   # fully general case: three passes
        (q,) = proj(query, [wq], [bq])
        (k,) = proj(key, [params["wk"]], [params["bk"]])
        (v,) = proj(value, [params["wv"]], [params["bv"]])

    if mask is None:
        mask3 = None
    else:
        # PyTorch: 2-D mask -> unsqueeze(0); >=3-D -> unsqueeze(1) (broadcast over heads).
        m = mask[None, :, :] if mask.ndim == 2 else mask
        mask3 = jnp.broadcast_to(m, (m.shape[0], Sq, Skv)).astype(jnp.int8)

    wo_t = params["wo"].T.astype(cdt)       # (d_model_in, d_model_out), one-time
    return _attention_output(q, k, v, mask3, wo_t, params["bo"],
                             h=h, d_k=d_k, tq=tq, tkv=tkv,
                             return_attn=return_attn, out_dtype=jnp.dtype(out_dtype),
                             vmem_limit_bytes=vmem_limit_bytes)


# --------------------------- pure-JAX reference ------------------------------

def reference_mha(params, query, key, value, mask, *, h):
    B, S, d_model = query.shape
    d_k = d_model // h

    def lin(x, w, b):
        return x @ w.T + b

    def proj(x, w, b):
        return lin(x, w, b).reshape(B, -1, h, d_k).transpose(0, 2, 1, 3)

    q = proj(query, params["wq"], params["bq"])
    k = proj(key, params["wk"], params["bk"])
    v = proj(value, params["wv"], params["bv"])

    scores = jnp.einsum("bhqd,bhkd->bhqk", q, k) / math.sqrt(d_k)
    if mask is not None:
        m = mask[None, None] if mask.ndim == 2 else mask[:, None]
        scores = jnp.where(m == 0, -1e9, scores)
    p = jax.nn.softmax(scores, axis=-1)
    x = jnp.einsum("bhqk,bhkd->bhqd", p, v)
    x = x.transpose(0, 2, 1, 3).reshape(B, -1, d_model)
    return lin(x, params["wo"], params["bo"]), p


# --------------------------------- main --------------------------------------

if __name__ == "__main__":
    B, S, d_model, h = 2, 8, 32, 4

    key0 = jax.random.PRNGKey(0)
    keys = jax.random.split(key0, 12)

    def w_init(kk):
        return (0.02 * jax.random.normal(kk, (d_model, d_model))).astype(jnp.float32)

    def b_init(kk):
        return (0.02 * jax.random.normal(kk, (d_model,))).astype(jnp.float32)

    params = {
        "wq": w_init(keys[0]), "bq": b_init(keys[1]),
        "wk": w_init(keys[2]), "bk": b_init(keys[3]),
        "wv": w_init(keys[4]), "bv": b_init(keys[5]),
        "wo": w_init(keys[6]), "bo": b_init(keys[7]),
    }

    query = jax.random.normal(keys[8], (B, S, d_model), dtype=jnp.float32)
    key_in = jax.random.normal(keys[9], (B, S, d_model), dtype=jnp.float32)
    value = jax.random.normal(keys[10], (B, S, d_model), dtype=jnp.float32)

    # 2-D causal mask (exercises masked_fill and PyTorch's 2-D mask broadcast rule)
    mask = jnp.tril(jnp.ones((S, S), dtype=jnp.int32))

    ref_out, ref_p = reference_mha(params, query, key_in, value, mask, h=h)

    # Default path: bf16 MXU inputs, fused attention + output projection.
    out_fast, _ = multi_headed_attention(params, query, key_in, value, mask, h=h)
    out_fast = jax.block_until_ready(out_fast)
    assert out_fast.shape == (B, S, d_model)
    assert jnp.allclose(out_fast, ref_out, atol=2e-2, rtol=2e-2)

    # f32 MXU-input path (tighter tolerance).
    out_f32, _ = multi_headed_attention(params, query, key_in, value, mask, h=h,
                                        qkv_dtype=jnp.float32)
    assert jnp.allclose(jax.block_until_ready(out_f32), ref_out, atol=2e-3, rtol=2e-3)

    # p_attn debug path (single KV tile => exact probabilities, module's self.attn).
    out_attn, p_attn = multi_headed_attention(params, query, key_in, value, mask, h=h,
                                              qkv_dtype=jnp.float32, return_attn=True)
    out_attn, p_attn = jax.block_until_ready((out_attn, p_attn))
    assert p_attn.shape == (B, h, S, S)
    assert jnp.allclose(out_attn, ref_out, atol=2e-3, rtol=2e-3)
    assert jnp.allclose(p_attn, ref_p, atol=2e-3, rtol=2e-3)

    # No-mask path.
    out_nm, _ = multi_headed_attention(params, query, key_in, value, None, h=h,
                                       qkv_dtype=jnp.float32)
    ref_nm, _ = reference_mha(params, query, key_in, value, None, h=h)
    assert jnp.allclose(jax.block_until_ready(out_nm), ref_nm, atol=2e-3, rtol=2e-3)

    # Self-attention (query is key is value): single fused QKV projection pallas_call.
    out_self, _ = multi_headed_attention(params, query, query, query, mask, h=h,
                                         qkv_dtype=jnp.float32)
    ref_self, _ = reference_mha(params, query, query, query, mask, h=h)
    assert jnp.allclose(jax.block_until_ready(out_self), ref_self, atol=2e-3, rtol=2e-3)

    # Shared K/V source (key is value): 1-output + 2-output projection calls.
    out_kv, _ = multi_headed_attention(params, query, key_in, key_in, mask, h=h,
                                       qkv_dtype=jnp.float32)
    ref_kv, _ = reference_mha(params, query, key_in, key_in, mask, h=h)
    assert jnp.allclose(jax.block_until_ready(out_kv), ref_kv, atol=2e-3, rtol=2e-3)

    print("KERNEL_OK")
</pallas_src>

<mosaic_0001>
module attributes {stable_mosaic.version = 11 : i64} {
  func.func @_proj_kernel(%arg0: i32, %arg1: i32, %arg2: memref<1x8x32xbf16, #tpu.memory_space<vmem>>, %arg3: memref<1x32x32xbf16, #tpu.memory_space<vmem>>, %arg4: memref<1x1x32xf32, #tpu.memory_space<vmem>>, %arg5: memref<1x8x32xbf16, #tpu.memory_space<vmem>>) attributes {dimension_semantics = [#tpu.dimension_semantics<parallel>, #tpu.dimension_semantics<parallel>], iteration_bounds = array<i64: 2, 1>, scalar_prefetch = 0 : i64, scratch_operands = 0 : i64, tpu.core_type = #tpu.core_type<tc>, window_params = [{transform_indices = @transform_0, window_bounds = array<i64: 1, 8, 32>}, {pipeline_mode = #tpu.pipeline_mode<synchronous>, transform_indices = @transform_1, window_bounds = array<i64: 1, 32, 32>}, {pipeline_mode = #tpu.pipeline_mode<synchronous>, transform_indices = @transform_2, window_bounds = array<i64: 1, 1, 32>}, {transform_indices = @transform_3, window_bounds = array<i64: 1, 8, 32>}]} {
    %c0 = arith.constant 0 : index
    %c0_0 = arith.constant 0 : index
    %c0_1 = arith.constant 0 : index
    %0 = vector.load %arg2[%c0, %c0_0, %c0_1] : memref<1x8x32xbf16, #tpu.memory_space<vmem>>, vector<1x8x32xbf16>
    %1 = vector.shape_cast %0 : vector<1x8x32xbf16> to vector<8x32xbf16>
    %c0_2 = arith.constant 0 : index
    %c0_3 = arith.constant 0 : index
    %c0_4 = arith.constant 0 : index
    %2 = vector.load %arg3[%c0_2, %c0_3, %c0_4] : memref<1x32x32xbf16, #tpu.memory_space<vmem>>, vector<1x32x32xbf16>
    %3 = vector.shape_cast %2 : vector<1x32x32xbf16> to vector<32x32xbf16>
    %cst = arith.constant dense<0.000000e+00> : vector<8x32xf32>
    %4 = tpu.matmul %1, %3, %cst {dimension_numbers = #tpu.dot_dimension_numbers<[1], [0], [0], [1], [0, 0, 1, 1], [], []>} : vector<8x32xbf16>, vector<32x32xbf16>, vector<8x32xf32> -> vector<8x32xf32>
    %c0_5 = arith.constant 0 : index
    %c0_6 = arith.constant 0 : index
    %c0_7 = arith.constant 0 : index
    %5 = vector.load %arg4[%c0_5, %c0_6, %c0_7] : memref<1x1x32xf32, #tpu.memory_space<vmem>>, vector<1x1x32xf32>
    %6 = vector.shape_cast %5 : vector<1x1x32xf32> to vector<1x32xf32>
    %7 = vector.broadcast %6 : vector<1x32xf32> to vector<8x32xf32>
    %8 = arith.addf %4, %7 : vector<8x32xf32>
    %9 = arith.truncf %8 : vector<8x32xf32> to vector<8x32xbf16>
    %c0_8 = arith.constant 0 : index
    %c0_9 = arith.constant 0 : index
    %c0_10 = arith.constant 0 : index
    %10 = vector.load %arg5[%c0_8, %c0_9, %c0_10] : memref<1x8x32xbf16, #tpu.memory_space<vmem>>, vector<1x8x32xbf16>
    %11 = vector.shape_cast %10 : vector<1x8x32xbf16> to vector<8x32xbf16>
    %12 = vector.shape_cast %9 : vector<8x32xbf16> to vector<1x8x32xbf16>
    tpu.vector_store %arg5[%c0_8, %c0_9, %c0_10], %12 {strides = array<i32>} : memref<1x8x32xbf16, #tpu.memory_space<vmem>>, vector<1x8x32xbf16>,
    return
  }
  func.func @transform_0(%arg0: i32, %arg1: i32) -> (i32, i32, i32) {
    %c0_i32 = arith.constant 0 : i32
    %c0_i32_0 = arith.constant 0 : i32
    return %arg0, %arg1, %c0_i32 : i32, i32, i32
  }
  func.func @transform_1(%arg0: i32, %arg1: i32) -> (i32, i32, i32) {
    %c0_i32 = arith.constant 0 : i32
    %c0_i32_0 = arith.constant 0 : i32
    %c0_i32_1 = arith.constant 0 : i32
    %c0_i32_2 = arith.constant 0 : i32
    return %c0_i32, %c0_i32_0, %c0_i32_1 : i32, i32, i32
  }
  func.func @transform_2(%arg0: i32, %arg1: i32) -> (i32, i32, i32) {
    %c0_i32 = arith.constant 0 : i32
    %c0_i32_0 = arith.constant 0 : i32
    %c0_i32_1 = arith.constant 0 : i32
    %c0_i32_2 = arith.constant 0 : i32
    return %c0_i32, %c0_i32_0, %c0_i32_1 : i32, i32, i32
  }
  func.func @transform_3(%arg0: i32, %arg1: i32) -> (i32, i32, i32) {
    %c0_i32 = arith.constant 0 : i32
    %c0_i32_0 = arith.constant 0 : i32
    return %arg0, %arg1, %c0_i32 : i32, i32, i32
  }
}

</mosaic_0001>

<llo_original>
// kernel: tpu_custom_call.1
$region0: #{tpu_custom_call.1}
  #allocation0 [shape = 'u32[]', space=smem, size = 0x4, offset = 0x4, fixed_abs, tag = 'smem constant byte address 0x4 - core index']
  #allocation1 [shape = 'u32[144,128]{1,0:T(1,128)}', space=vmem, size = 0x12000, scoped, tag = 'internal scratch']
  %s0 = inlined_call_operand.hbm [shape: bf16[2,8,32], index: 0, kind: input, shape index: {}]
  %s1 = inlined_call_operand.hbm [shape: bf16[1,32,32], index: 1, kind: input, shape index: {}]
  %s2 = inlined_call_operand.vmem [shape: f32[1,1,32], index: 2, kind: input, shape index: {}]
  %s3 = inlined_call_operand.hbm [shape: bf16[2,8,32], index: 3, kind: output, shape index: {}]
  %s4 = sld [smem:[#allocation0]]
  $region53: #{tpu_custom_call.1} parent=0
    _
  %s6 = ssub.s32 1, %s4
  %s7 = scalar_select 0, %s6, %s4
  $region1: #{tpu_custom_call.1} parent=0
    #allocation2 [shape = 'u8[4096]{0}', space=vmem, size = 0x1000, scoped, tag = 'input window, operand 0']
    #allocation3 [shape = 's32[2]{0}', space=sflag, size = 0x8, scoped, tag = 'scoped memory for tpu_custom_call.1']
    #allocation4 [shape = 's32[2]{0}', space=sflag, size = 0x8, scoped, tag = 'scoped memory for tpu_custom_call.1']
    #allocation5 [shape = 'u8[8192]{0}', space=vmem, size = 0x2000, scoped, tag = 'input window, operand 1, single buffered']
    #allocation6 [shape = 's32[1]{0}', space=sflag, size = 0x4, scoped, tag = 'scoped memory for tpu_custom_call.1']
    #allocation7 [shape = 'u8[4096]{0}', space=vmem, size = 0x1000, scoped, tag = 'output window, operand 0']
    %8 = vsyncpa [#allocation3], 0
    %s9 = scalar_lea.sflag [#allocation3], 1
    %10 = vsyncpa %s9, 0
    %11 = vsyncpa [#allocation6], 0
    %12 = vsyncpa [#allocation4], 0
    %s13 = scalar_lea.sflag [#allocation4], 1
    %14 = vsyncpa %s13, 0
    loop: start=0, step=1, limit=4
    $region2: #{tpu_custom_call.1} parent=1 // loop_pre_header
      _
    $region3: #{tpu_custom_call.1} parent=1 // loop_header
      %s16 = sphi 0, %s20
      %p17 = scmp.ge.s32.totalorder %s16, 4
      %s23 = sphi 0, %s35
      %s24 = sphi 0, %s31
      %s25 = sphi 0, %s23
      %s26 = sphi 0, %s24
      %s27 = sphi 0, %s25
      %s28 = sphi 0, %s26
      %s40 = sphi 0, %s42
      %s43 = sphi 0, %s40
      %s44 = sphi 0, %s43
      %s60 = sphi 0, %s44
      %s64 = sphi 0, %s64
      %s66 = sphi 0, %s64
      %s67 = sphi 0, %s66
      %s81 = sphi 0, %s67
      %s85 = sphi 0, %s85
      %s87 = sphi 0, %s85
      %s88 = sphi 0, %s87
      %s102 = sphi 0, %s88
      %s110 = sphi 0, %s112
      %s113 = sphi 0, %s110
      %s114 = sphi 0, %s113
      %s130 = sphi 0, %s114
    $region4: #{tpu_custom_call.1} parent=1 // loop_header_branch
      %19 = sbr.rel (%p17) target = $region8
    $region5: #{tpu_custom_call.1} parent=1 // loop_body
      %s21 = ssub.s32 %s16, 1
      %s22 = ssub.s32 %s16, 2
      %s29 = sadd.s32 1, %s24
      %p30 = scmp.ge.s32.totalorder %s29, 1
      %s31 = scalar_select %p30, 0, %s29
      %s32 = sadd.s32 1, %s23
      %s33 = scalar_select %p30, %s32, %s23
      %p34 = scmp.ge.s32.totalorder %s33, 2
      %s35 = scalar_select %p34, 0, %s33
      %s36 = ssub.s32 %s23, %s35
      %s37 = ssub.s32 %s24, %s31
      %s38 = sor.u32 %s36, %s37
      %p39 = scmp.eq.s32.totalorder %s38, 0
      %s41 = sadd.s32 %s40, 1
      %s42 = scalar_select %p39, %s40, %s41
      %p45 = pneg %p39
      %p46 = scmp.eq.s32.totalorder %s16, 1
      %p47 = por %p45, %p46
      %p48 = scmp.ne.s32.totalorder %s40, %s43
      %p49 = scmp.eq.s32.totalorder %s16, 0
      %p50 = por %p48, %p49
      %p51 = scmp.ne.s32.totalorder %s40, %s43
      %p52 = scmp.eq.s32.totalorder %s21, 1
      %p53 = por %p51, %p52
      %p54 = scmp.ne.s32.totalorder %s43, %s44
      %p55 = scmp.eq.s32.totalorder %s21, 0
      %p56 = por %p54, %p55
      %p57 = scmp.ne.s32.totalorder %s43, %s44
      %p58 = scmp.eq.s32.totalorder %s22, 1
      %p59 = por %p57, %p58
      %p61 = scmp.ne.s32.totalorder %s44, %s60
      %p62 = scmp.eq.s32.totalorder %s22, 0
      %p63 = por %p61, %p62
      %s65 = sadd.s32 %s64, 1
      %p68 = scmp.eq.s32.totalorder %s16, 1
      %p69 = scmp.ne.s32.totalorder %s64, %s66
      %p70 = scmp.eq.s32.totalorder %s16, 0
      %p71 = por %p69, %p70
      %p72 = scmp.ne.s32.totalorder %s64, %s66
      %p73 = scmp.eq.s32.totalorder %s21, 1
      %p74 = por %p72, %p73
      %p75 = scmp.ne.s32.totalorder %s66, %s67
      %p76 = scmp.eq.s32.totalorder %s21, 0
      %p77 = por %p75, %p76
      %p78 = scmp.ne.s32.totalorder %s66, %s67
      %p79 = scmp.eq.s32.totalorder %s22, 1
      %p80 = por %p78, %p79
      %p82 = scmp.ne.s32.totalorder %s67, %s81
      %p83 = scmp.eq.s32.totalorder %s22, 0
      %p84 = por %p82, %p83
      %s86 = sadd.s32 %s85, 1
      %p89 = scmp.eq.s32.totalorder %s16, 1
      %p90 = scmp.ne.s32.totalorder %s85, %s87
      %p91 = scmp.eq.s32.totalorder %s16, 0
      %p92 = por %p90, %p91
      %p93 = scmp.ne.s32.totalorder %s85, %s87
      %p94 = scmp.eq.s32.totalorder %s21, 1
      %p95 = por %p93, %p94
      %p96 = scmp.ne.s32.totalorder %s87, %s88
      %p97 = scmp.eq.s32.totalorder %s21, 0
      %p98 = por %p96, %p97
      %p99 = scmp.ne.s32.totalorder %s87, %s88
      %p100 = scmp.eq.s32.totalorder %s22, 1
      %p101 = por %p99, %p100
      %p103 = scmp.ne.s32.totalorder %s88, %s102
      %p104 = scmp.eq.s32.totalorder %s22, 0
      %p105 = por %p103, %p104
      %s106 = ssub.s32 %s23, %s35
      %s107 = ssub.s32 %s24, %s31
      %s108 = sor.u32 %s106, %s107
      %p109 = scmp.eq.s32.totalorder %s108, 0
      %s111 = sadd.s32 %s110, 1
      %s112 = scalar_select %p109, %s110, %s111
      %p115 = pneg %p109
      %p116 = scmp.eq.s32.totalorder %s16, 1
      %p117 = por %p115, %p116
      %p118 = scmp.ne.s32.totalorder %s110, %s113
      %p119 = scmp.eq.s32.totalorder %s16, 0
      %p120 = por %p118, %p119
      %p121 = scmp.ne.s32.totalorder %s110, %s113
      %p122 = scmp.eq.s32.totalorder %s21, 1
      %p123 = por %p121, %p122
      %p124 = scmp.ne.s32.totalorder %s113, %s114
      %p125 = scmp.eq.s32.totalorder %s21, 0
      %p126 = por %p124, %p125
      %p127 = scmp.ne.s32.totalorder %s113, %s114
      %p128 = scmp.eq.s32.totalorder %s22, 1
      %p129 = por %p127, %p128
      %p131 = scmp.ne.s32.totalorder %s114, %s130
      %p132 = scmp.eq.s32.totalorder %s22, 0
      %p133 = por %p131, %p132
      %p134 = scmp.le.s32.totalorder 1, %s16
      %p135 = scmp.lt.s32.totalorder %s16, 3
      %p136 = pnand %p134, %p135
      %p137 = pneg %p136
      // Predicated region
      $region9: #{tpu_custom_call.1} parent=5 // pred_check
        _
      $region10: #{tpu_custom_call.1} parent=5 // pred_check_branch
        %139 = sbr.rel (%p136) target = $region12
      $region11: #{tpu_custom_call.1} parent=5 // pred_region
        %s140 = ssub.s32 %s16, 1
        // Predicated region
        $region13: #{tpu_custom_call.1} parent=11 // pred_check
          %p141 = pneg %p77
        $region14: #{tpu_custom_call.1} parent=11 // pred_check_branch
          %143 = sbr.rel (%p141) target = $region16
        $region15: #{tpu_custom_call.1} parent=11 // pred_region
          %s145 = ssub.s32 256, 256
          %146 = vsyncadd [#allocation6], %s145
          %s147 = sshll.u32 [#allocation5], 4
          %s148 = int_to_ptr.vmem [resolvable:$true] %s147
          %153 = dma.hbm_to_vmem [thread:$0]  %s1, 256, %s148, [#allocation6], 64, 64, 4
        $region16: #{tpu_custom_call.1} parent=11 // pred_fallthru
          _
        // Predicated region
        $region17: #{tpu_custom_call.1} parent=11 // pred_check
          %p154 = pneg %p98
        $region18: #{tpu_custom_call.1} parent=11 // pred_check_branch
          %156 = sbr.rel (%p154) target = $region20
        $region19: #{tpu_custom_call.1} parent=11 // pred_region
          _
        $region20: #{tpu_custom_call.1} parent=11 // pred_fallthru
          _
      $region12: #{tpu_custom_call.1} parent=5 // pred_fallthru
        _
      %p157 = scmp.lt.s32.totalorder %s16, 2
      // Predicated region
      $region21: #{tpu_custom_call.1} parent=5 // pred_check
        %p158 = pneg %p157
      $region22: #{tpu_custom_call.1} parent=5 // pred_check_branch
        %160 = sbr.rel (%p158) target = $region24
      $region23: #{tpu_custom_call.1} parent=5 // pred_region
        // Predicated region
        $region25: #{tpu_custom_call.1} parent=23 // pred_check
          %p161 = pneg %p50
        $region26: #{tpu_custom_call.1} parent=23 // pred_check_branch
          %163 = sbr.rel (%p161) target = $region28
        $region27: #{tpu_custom_call.1} parent=23 // pred_region
          %s164 = sand.u32 %s40, 1
          %s165 = scalar_lea.sflag [#allocation3], %s164
          %s166 = sand.u32 %s40, 1
          %s167 = smul.addr %s166, 4
          %s168 = scalar_lea.vmem [#allocation2], %s167
          %s170 = ssub.s32 64, 64
          %171 = vsyncadd %s165, %s170
          %s172 = sadd.s32 %s24, %s23
          %s173 = smul.addr %s172, 64
          %s174 = scalar_lea.hbm %s0, %s173
          %s176 = sshll.u32 %s168, 4
          %s177 = int_to_ptr.vmem [resolvable:$true] %s176
          %179 = dma.hbm_to_vmem [thread:$0]  %s174, 64, %s177, %s165
        $region28: #{tpu_custom_call.1} parent=23 // pred_fallthru
          _
      $region24: #{tpu_custom_call.1} parent=5 // pred_fallthru
        _
      %p180 = scmp.le.s32.totalorder 1, %s16
      %p181 = scmp.lt.s32.totalorder %s16, 3
      %p182 = pnand %p180, %p181
      %p183 = pneg %p182
      // Predicated region
      $region29: #{tpu_custom_call.1} parent=5 // pred_check
        _
      $region30: #{tpu_custom_call.1} parent=5 // pred_check_branch
        %185 = sbr.rel (%p182) target = $region32
      $region31: #{tpu_custom_call.1} parent=5 // pred_region
        %s186 = ssub.s32 %s16, 1
        %s187 = sand.u32 %s43, 1
        %s188 = scalar_lea.sflag [#allocation3], %s187
        %s189 = sand.u32 %s43, 1
        %s190 = smul.addr %s189, 4
        %s191 = scalar_lea.vmem [#allocation2], %s190
        // Predicated region
        $region33: #{tpu_custom_call.1} parent=31 // pred_check
          %p192 = pneg %p56
        $region34: #{tpu_custom_call.1} parent=31 // pred_check_branch
          %194 = sbr.rel (%p192) target = $region36
        $region35: #{tpu_custom_call.1} parent=31 // pred_region
          %195 = dma.done %s188, 64
        $region36: #{tpu_custom_call.1} parent=31 // pred_fallthru
          _
        // Predicated region
        $region37: #{tpu_custom_call.1} parent=31 // pred_check
          %p196 = pneg %p77
        $region38: #{tpu_custom_call.1} parent=31 // pred_check_branch
          %198 = sbr.rel (%p196) target = $region40
        $region39: #{tpu_custom_call.1} parent=31 // pred_region
          %199 = dma.done [#allocation6], 256
        $region40: #{tpu_custom_call.1} parent=31 // pred_fallthru
          _
        %s200 = sand.u32 %s43, 1
        %s201 = scalar_lea.sflag [#allocation3], %s200
        %s202 = sand.u32 %s43, 1
        %s203 = smul.addr %s202, 4
        %s204 = scalar_lea.vmem [#allocation2], %s203
        %p205 = pneg %p56
        %p206 = pneg %p53
        %p207 = pneg %p77
        %p208 = pneg %p74
        %p209 = pneg %p98
        %p210 = pneg %p95
        %p211 = pneg %p126
        %p212 = pneg %p123
        %s213 = sand.u32 %s113, 1
        %s214 = scalar_lea.sflag [#allocation4], %s213
        %s215 = sand.u32 %s113, 1
        %s216 = smul.addr %s215, 4
        %s217 = scalar_lea.vmem [#allocation7], %s216
        %v219 = vld [vmem:[%s191] sm:$0xf]
        %v220 = vld [vmem:[#allocation5] sm:$0xf]
        %v221 = vld [vmem:[#allocation5 + $0x4] sm:$0xf]
        %v222 = vld [vmem:[#allocation5 + $0x8] sm:$0xf]
        %v223 = vld [vmem:[#allocation5 + $0xc] sm:$0xf]
        %v224 = vld [vmem:[%s2] sm:$0x1]
        %v226 = vlaneseq
        %v227 = vshrl.u32 %v226, 7
        %v228 = vsub.s32 0, %v227
        %v229 = vrot.slane %v224, %v228
        %v235 = vunpack.c.l.b16 %v220
        %v236 = vunpack.c.l.b16 %v221
        %v237 = vunpack.c.l.b16 %v222
        %v238 = vunpack.c.l.b16 %v223
        %v239 = vpack.c.b16 %v236, %v235
        %v240 = vpack.c.b16 %v238, %v237
        %vm243 = vcmask 261120
        %v245 = vsel %vm243, %v219, 0
        %247 = vmatprep.subr.bf16.mxu0 0
        %248 = vmatpush1.bf16.msra.mxu0 0
        %249 = vmatprep.subr.bf16.mxu0 0
        %250 = vmatpush1.bf16.msra.mxu0 0
        %251 = vmatprep.subr.bf16.mxu0 0
        %252 = vmatpush1.bf16.msra.mxu0 0
        %253 = vmatprep.subr.bf16.mxu0 0
        %254 = vmatpush1.bf16.msra.mxu0 0
        %255 = vmatprep.subr.bf16.mxu0 0
        %256 = vmatpush1.bf16.msra.mxu0 0
        %257 = vmatprep.subr.bf16.mxu0 0
        %258 = vmatpush1.bf16.msra.mxu0 0
        %259 = vmatprep.subr.bf16.mxu0 0
        %260 = vmatpush1.bf16.msra.mxu0 %v240
        %261 = vmatprep.subr.bf16.mxu0 0
        %262 = vmatpush1.bf16.msra.mxu0 %v239
        %263 = vmatprep.subr.bf16.mxu0 0
        %264 = vmatpush2.bf16.msra.mxu0 0
        %265 = vmatprep.subr.bf16.mxu0 0
        %266 = vmatpush2.bf16.msra.mxu0 0
        %267 = vmatprep.subr.bf16.mxu0 0
        %268 = vmatpush2.bf16.msra.mxu0 0
        %269 = vmatprep.subr.bf16.mxu0 0
        %270 = vmatpush2.bf16.msra.mxu0 0
        %271 = vmatprep.subr.bf16.mxu0 0
        %272 = vmatpush2.bf16.msra.mxu0 0
        %273 = vmatprep.subr.bf16.mxu0 0
        %274 = vmatpush2.bf16.msra.mxu0 0
        %275 = vmatprep.subr.bf16.mxu0 0
        %276 = vmatpush2.bf16.msra.mxu0 0
        %277 = vmatprep.subr.bf16.mxu0 0
        %278 = vmatpush2.bf16.msra.mxu0 0
        %279 = vmatprep.mubr.bf16.mxu0 0
        %280 = vmatmul.mubr.bf16.gmra.mxu0 %v245
        %v281 = vpop.f32.mrf.mxu0
        %v282 = vadd.f32 %v229, %v281
        %v283 = vpop.f32.mrf.mxu0
        %v284 = vpop.f32.mrf.mxu0
        %v285 = vpop.f32.mrf.mxu0
        %286 = vdwg.mxu0
        %v287 = vpack.c.bf16 %v282, %v282
        %vm288 = vcmask 257024
        %289 = vst.msk [vmem:[%s217] sm:$0xf] %vm288, %v287
        %s290 = sand.u32 %s113, 1
        %s291 = scalar_lea.sflag [#allocation4], %s290
        %s292 = sand.u32 %s113, 1
        %s293 = smul.addr %s292, 4
        %s294 = scalar_lea.vmem [#allocation7], %s293
        // Predicated region
        $region41: #{tpu_custom_call.1} parent=31 // pred_check
          %p295 = pneg %p123
        $region42: #{tpu_custom_call.1} parent=31 // pred_check_branch
          %297 = sbr.rel (%p295) target = $region44
        $region43: #{tpu_custom_call.1} parent=31 // pred_region
          %s299 = ssub.s32 64, 64
          %300 = vsyncadd %s291, %s299
          %s301 = sadd.s32 %s26, %s25
          %s302 = smul.addr %s301, 64
          %s303 = scalar_lea.hbm %s3, %s302
          %s305 = sshll.u32 %s294, 4
          %s306 = int_to_ptr.vmem [resolvable:$true] %s305
          %308 = dma.vmem_to_hbm [thread:$0]  %s306, 64, %s303, %s291
        $region44: #{tpu_custom_call.1} parent=31 // pred_fallthru
          _
      $region32: #{tpu_custom_call.1} parent=5 // pred_fallthru
        _
      %p309 = scmp.le.s32.totalorder 2, %s16
      // Predicated region
      $region45: #{tpu_custom_call.1} parent=5 // pred_check
        %p310 = pneg %p309
      $region46: #{tpu_custom_call.1} parent=5 // pred_check_branch
        %312 = sbr.rel (%p310) target = $region48
      $region47: #{tpu_custom_call.1} parent=5 // pred_region
        %s313 = ssub.s32 %s16, 2
        // Predicated region
        $region49: #{tpu_custom_call.1} parent=47 // pred_check
          %p314 = pneg %p129
        $region50: #{tpu_custom_call.1} parent=47 // pred_check_branch
          %316 = sbr.rel (%p314) target = $region52
        $region51: #{tpu_custom_call.1} parent=47 // pred_region
          %s317 = sand.u32 %s114, 1
          %s318 = scalar_lea.sflag [#allocation4], %s317
          %s319 = sand.u32 %s114, 1
          %s320 = smul.addr %s319, 4
          %s321 = scalar_lea.vmem [#allocation7], %s320
          %322 = dma.done %s318, 64
        $region52: #{tpu_custom_call.1} parent=47 // pred_fallthru
          _
      $region48: #{tpu_custom_call.1} parent=5 // pred_fallthru
        _
    $region6: #{tpu_custom_call.1} parent=1 // loop_footer
      %s20 = sadd.s32 1, %s16
    $region7: #{tpu_custom_call.1} parent=1 // loop_footer_branch
      %15 = sbr.rel target = $region3
    $region8: #{tpu_custom_call.1} parent=1 // loop_exit
      _
    %323 = vsyncpa [#allocation3], 1
    %s324 = scalar_lea.sflag [#allocation3], 1
    %325 = vsyncpa %s324, 1
    %326 = vsyncpa [#allocation6], 1
    %327 = vsyncpa [#allocation4], 1
    %s328 = scalar_lea.sflag [#allocation4], 1
    %329 = vsyncpa %s328, 1

</llo_original>
